<compile_context>
chip_gen: v7x
topology: tpu7x:2x2x1
jax: 0.10.0
libtpu: 0.0.40
codegen_flags: <defaults>
</compile_context>

<pallas_src>
import jax
import jax.numpy as jnp
from jax.experimental import pallas as pl
from jax.experimental.pallas import tpu as pltpu


def _round_up(x: int, m: int) -> int:
    return pl.cdiv(x, m) * m


def qnet_duel_argmax_kernel(x_ref, w1_ref, b1_ref, wf_ref, bf_ref, out_ref):
    """One batch tile.

    x  : (TB, S)  f32   -- raw batch-major states (pipelined over the grid)
    w1 : (H1, S)  bf16  b1 : (H1, 1) f32
    wf : (A, H1)  bf16  bf : (A, 1)  f32   -- value head fused through layer 2
    out: (1, TB)  i32   -- argmax action per state (batch on the lane axis)
    """
    # Feature-major layout: put the batch on the 128-lane axis so all
    # intermediates and the int32 output are lane-dense.  The (TB, S)->(S, TB)
    # transpose is XLU work on the VMEM-resident tile, overlapped with the
    # HBM DMA of the next tile (this kernel is HBM-bound).
    xt = x_ref[...].T.astype(jnp.bfloat16)                       # (S, TB)

    # Layer 1: Linear + ReLU (bf16 at the MXU, f32 accumulation).
    h1 = jnp.dot(w1_ref[...], xt,
                 preferred_element_type=jnp.float32) + b1_ref[...]
    h1 = jnp.maximum(h1, 0.0)                                    # (H1, TB) f32

    # Layer 2 + value head fused offline (exact: no nonlinearity after w2).
    # The adv head and the row-mean are skipped on purpose: they shift every
    # action of a row by the same constant, so argmax(value) == argmax(q_val).
    q = jnp.dot(wf_ref[...], h1.astype(jnp.bfloat16),
                preferred_element_type=jnp.float32) + bf_ref[...]  # (A, TB)

    # argmax over the action axis (axis 0), first-occurrence tie-break
    # (assumes finite inputs, matching torch/jnp argmax behavior).
    a_dim = q.shape[0]
    q_max = jnp.max(q, axis=0, keepdims=True)                    # (1, TB)
    act_ids = jax.lax.broadcasted_iota(jnp.int32, q.shape, 0)
    masked = jnp.where(q == q_max, act_ids, a_dim)
    out_ref[...] = jnp.min(masked, axis=0, keepdims=True)        # (1, TB) i32


def fuse_value_head(params):
    """Fold the value head through layer 2 (exact: no activation after w2)."""
    w2 = params["w2"].astype(jnp.float32)
    b2 = params["b2"].astype(jnp.float32)
    wv = params["wv"].astype(jnp.float32)
    bv = params["bv"].astype(jnp.float32)
    w_fused = (wv @ w2).astype(jnp.bfloat16)        # (A, H1)
    b_fused = wv @ b2 + bv                          # (A, 1) f32
    return w_fused, b_fused


def _resident(shape):
    """Full-array block with a constant block index -> stays VMEM-resident."""
    return pl.BlockSpec(shape, lambda i: (0,) * len(shape))


def qnet_duel_forward(state, params, *, tb: int = 8192):
    """Returns argmax action indices, shape (B,), dtype int32."""
    B, state_dim = state.shape
    w_fused, b_fused = fuse_value_head(params)

    # Lane-alignment pad only (<=127 rows); skipped entirely (no HBM copy)
    # when B is already a multiple of 128.
    b_pad = _round_up(B, 128)
    if b_pad != B:
        state = jnp.pad(state, ((0, b_pad - B), (0, 0)))

    # Big tiles amortize the per-grid-step overhead; cap so the grid keeps
    # >=4 steps when the batch allows (2-TC sharding on v7x, pipelining
    # everywhere).  128 <= tb <= b_pad always holds.
    tb = max(128, min(tb, _round_up(pl.cdiv(b_pad, 4), 128)))
    grid = pl.cdiv(b_pad, tb)   # ragged last block: OOB reads only feed
                                # padded output lanes, OOB writes are masked.

    out = pl.pallas_call(
        qnet_duel_argmax_kernel,
        out_shape=jax.ShapeDtypeStruct((1, b_pad), jnp.int32),
        grid=(grid,),
        in_specs=[
            pl.BlockSpec((tb, state_dim), lambda i: (i, 0)),   # pipelined states
            _resident(params["w1"].shape),
            _resident(params["b1"].shape),
            _resident(w_fused.shape),
            _resident(b_fused.shape),
        ],
        out_specs=pl.BlockSpec((1, tb), lambda i: (0, i)),     # lane-dense i32
        compiler_params=pltpu.CompilerParams(
            dimension_semantics=("parallel",),   # shard batch across TCs (v7x)
            vmem_limit_bytes=32 * 1024 * 1024,   # ~10 MiB used at tb=8192
        ),
    )(state, params["w1"], params["b1"], w_fused, b_fused)

    return out[0, :B]


def init_params(key, state_dim, net_dims, action_dim):
    """Deterministic synthetic parameters, nn.Linear-style (out, in) weights.
    Weights bf16 (MXU-native), biases (out, 1) f32.  Orthogonal init is
    approximated with scaled normals (synthetic weights, not a checkpoint)."""
    h1, h2 = net_dims
    ks = jax.random.split(key, 8)

    def w(k, o, i, std=1.0):
        return (jax.random.normal(k, (o, i), jnp.float32)
                * (std / jnp.sqrt(i))).astype(jnp.bfloat16)

    def b(k, o):
        return jax.random.normal(k, (o, 1), jnp.float32) * 0.01

    return {
        "w1": w(ks[0], h1, state_dim), "b1": b(ks[1], h1),
        "w2": w(ks[2], h2, h1),        "b2": b(ks[3], h2),
        "wv": w(ks[4], action_dim, h2, 0.1), "bv": b(ks[5], action_dim),
        # adv head: argmax-invariant, used only by the pure-JAX reference.
        "wa": w(ks[6], 1, h2, 0.1),          "ba": b(ks[7], 1),
    }


def reference_dueling_values(state, p):
    """Pure-JAX f32 replica of QNetDuel.forward's dueling values (B, A)."""
    def lin(x, w, bias):
        return x @ w.astype(jnp.float32).T + bias.reshape(1, -1)

    h1 = jnp.maximum(lin(state, p["w1"], p["b1"]), 0.0)
    s_enc = lin(h1, p["w2"], p["b2"])
    q_val = lin(s_enc, p["wv"], p["bv"])
    q_adv = lin(s_enc, p["wa"], p["ba"])
    return q_val - q_val.mean(axis=1, keepdims=True) + q_adv


if __name__ == "__main__":
    key = jax.random.PRNGKey(0)
    k_param, k_state = jax.random.split(key)

    batch = 2
    state_dim = 16
    net_dims = [32, 32]
    action_dim = 8

    params = init_params(k_param, state_dim, net_dims, action_dim)
    state = jax.random.normal(k_state, (batch, state_dim), jnp.float32)

    actions = qnet_duel_forward(state, params)
    jax.block_until_ready(actions)

    assert actions.shape == (batch,)
    assert actions.dtype == jnp.int32
    assert bool(jnp.all((actions >= 0) & (actions < action_dim)))

    # The dueling shift (- mean + adv) is a per-row constant, so the kernel's
    # argmax(q_val) must select an action whose full f32 dueling value is the
    # row maximum up to bf16-vs-f32 rounding on near ties (tolerance check
    # instead of exact argmax equality, per the correctness review).
    value = reference_dueling_values(state, params)              # (B, A) f32
    chosen = jnp.take_along_axis(value, actions[:, None], axis=1)[:, 0]
    assert bool(jnp.all(chosen >= value.max(axis=1) - 5e-3)), (actions, value)

    print("KERNEL_OK")
</pallas_src>

<mosaic_0001>
module attributes {stable_mosaic.version = 11 : i64} {
  func.func @qnet_duel_argmax_kernel(%arg0: i32, %arg1: memref<128x16xf32, #tpu.memory_space<vmem>>, %arg2: memref<32x16xbf16, #tpu.memory_space<vmem>>, %arg3: memref<32x1xf32, #tpu.memory_space<vmem>>, %arg4: memref<8x32xbf16, #tpu.memory_space<vmem>>, %arg5: memref<8x1xf32, #tpu.memory_space<vmem>>, %arg6: memref<1x128xi32, #tpu.memory_space<vmem>>) attributes {dimension_semantics = [#tpu.dimension_semantics<parallel>], iteration_bounds = array<i64: 1>, scalar_prefetch = 0 : i64, scratch_operands = 0 : i64, tpu.core_type = #tpu.core_type<tc>, window_params = [{transform_indices = @transform_0, window_bounds = array<i64: 128, 16>}, {pipeline_mode = #tpu.pipeline_mode<synchronous>, transform_indices = @transform_1, window_bounds = array<i64: 32, 16>}, {pipeline_mode = #tpu.pipeline_mode<synchronous>, transform_indices = @transform_2, window_bounds = array<i64: 32, 1>}, {pipeline_mode = #tpu.pipeline_mode<synchronous>, transform_indices = @transform_3, window_bounds = array<i64: 8, 32>}, {pipeline_mode = #tpu.pipeline_mode<synchronous>, transform_indices = @transform_4, window_bounds = array<i64: 8, 1>}, {transform_indices = @transform_5, window_bounds = array<i64: 1, 128>}]} {
    %c0 = arith.constant 0 : index
    %c0_0 = arith.constant 0 : index
    %0 = vector.load %arg1[%c0, %c0_0] : memref<128x16xf32, #tpu.memory_space<vmem>>, vector<128x16xf32>
    %1 = tpu.transpose %0, [1, 0] : vector<128x16xf32> -> vector<16x128xf32>
    %2 = arith.truncf %1 : vector<16x128xf32> to vector<16x128xbf16>
    %c0_1 = arith.constant 0 : index
    %c0_2 = arith.constant 0 : index
    %3 = vector.load %arg2[%c0_1, %c0_2] : memref<32x16xbf16, #tpu.memory_space<vmem>>, vector<32x16xbf16>
    %cst = arith.constant dense<0.000000e+00> : vector<32x128xf32>
    %4 = tpu.matmul %3, %2, %cst {dimension_numbers = #tpu.dot_dimension_numbers<[1], [0], [0], [1], [0, 0, 1, 1], [], []>} : vector<32x16xbf16>, vector<16x128xbf16>, vector<32x128xf32> -> vector<32x128xf32>
    %c0_3 = arith.constant 0 : index
    %c0_4 = arith.constant 0 : index
    %5 = vector.load %arg3[%c0_3, %c0_4] : memref<32x1xf32, #tpu.memory_space<vmem>>, vector<32x1xf32>
    %6 = vector.broadcast %5 : vector<32x1xf32> to vector<32x128xf32>
    %7 = arith.addf %4, %6 : vector<32x128xf32>
    %cst_5 = arith.constant 0.000000e+00 : f32
    %8 = vector.broadcast %cst_5 : f32 to vector<32x128xf32>
    %9 = arith.maximumf %7, %8 : vector<32x128xf32>
    %c0_6 = arith.constant 0 : index
    %c0_7 = arith.constant 0 : index
    %10 = vector.load %arg4[%c0_6, %c0_7] : memref<8x32xbf16, #tpu.memory_space<vmem>>, vector<8x32xbf16>
    %11 = arith.truncf %9 : vector<32x128xf32> to vector<32x128xbf16>
    %cst_8 = arith.constant dense<0.000000e+00> : vector<8x128xf32>
    %12 = tpu.matmul %10, %11, %cst_8 {dimension_numbers = #tpu.dot_dimension_numbers<[1], [0], [0], [1], [0, 0, 1, 1], [], []>} : vector<8x32xbf16>, vector<32x128xbf16>, vector<8x128xf32> -> vector<8x128xf32>
    %c0_9 = arith.constant 0 : index
    %c0_10 = arith.constant 0 : index
    %13 = vector.load %arg5[%c0_9, %c0_10] : memref<8x1xf32, #tpu.memory_space<vmem>>, vector<8x1xf32>
    %14 = vector.broadcast %13 : vector<8x1xf32> to vector<8x128xf32>
    %15 = arith.addf %12, %14 : vector<8x128xf32>
    %cst_11 = arith.constant dense<0xFF800000> : vector<128xf32>
    %16 = vector.multi_reduction <maximumf>, %15, %cst_11 [0] : vector<8x128xf32> to vector<128xf32>
    %17 = vector.shape_cast %16 : vector<128xf32> to vector<1x128xf32>
    %18 = tpu.iota {dimensions = array<i32: 0>} : vector<8x128xi32>
    %19 = vector.broadcast %17 : vector<1x128xf32> to vector<8x128xf32>
    %20 = arith.cmpf oeq, %15, %19 : vector<8x128xf32>
    %c8_i32 = arith.constant 8 : i32
    %21 = vector.broadcast %c8_i32 : i32 to vector<8x128xi32>
    %22 = arith.select %20, %18, %21 : vector<8x128xi1>, vector<8x128xi32>
    %cst_12 = arith.constant dense<2147483647> : vector<128xi32>
    %23 = vector.multi_reduction <minsi>, %22, %cst_12 [0] : vector<8x128xi32> to vector<128xi32>
    %24 = vector.shape_cast %23 : vector<128xi32> to vector<1x128xi32>
    %c0_13 = arith.constant 0 : index
    %c0_14 = arith.constant 0 : index
    %25 = vector.load %arg6[%c0_13, %c0_14] : memref<1x128xi32, #tpu.memory_space<vmem>>, vector<1x128xi32>
    tpu.vector_store %arg6[%c0_13, %c0_14], %24 {strides = array<i32>} : memref<1x128xi32, #tpu.memory_space<vmem>>, vector<1x128xi32>,
    return
  }
  func.func @transform_0(%arg0: i32) -> (i32, i32) {
    %c0_i32 = arith.constant 0 : i32
    %c0_i32_0 = arith.constant 0 : i32
    return %arg0, %c0_i32 : i32, i32
  }
  func.func @transform_1(%arg0: i32) -> (i32, i32) {
    %c0_i32 = arith.constant 0 : i32
    %c0_i32_0 = arith.constant 0 : i32
    %c0_i32_1 = arith.constant 0 : i32
    return %c0_i32, %c0_i32_0 : i32, i32
  }
  func.func @transform_2(%arg0: i32) -> (i32, i32) {
    %c0_i32 = arith.constant 0 : i32
    %c0_i32_0 = arith.constant 0 : i32
    %c0_i32_1 = arith.constant 0 : i32
    return %c0_i32, %c0_i32_0 : i32, i32
  }
  func.func @transform_3(%arg0: i32) -> (i32, i32) {
    %c0_i32 = arith.constant 0 : i32
    %c0_i32_0 = arith.constant 0 : i32
    %c0_i32_1 = arith.constant 0 : i32
    return %c0_i32, %c0_i32_0 : i32, i32
  }
  func.func @transform_4(%arg0: i32) -> (i32, i32) {
    %c0_i32 = arith.constant 0 : i32
    %c0_i32_0 = arith.constant 0 : i32
    %c0_i32_1 = arith.constant 0 : i32
    return %c0_i32, %c0_i32_0 : i32, i32
  }
  func.func @transform_5(%arg0: i32) -> (i32, i32) {
    %c0_i32 = arith.constant 0 : i32
    %c0_i32_0 = arith.constant 0 : i32
    return %c0_i32, %arg0 : i32, i32
  }
}

</mosaic_0001>

<llo_original>
// kernel: tpu_custom_call.1
$region0: #{tpu_custom_call.1}
  #allocation0 [shape = 'u32[]', space=smem, size = 0x4, offset = 0x4, fixed_abs, tag = 'smem constant byte address 0x4 - core index']
  #allocation1 [shape = 'u32[144,128]{1,0:T(1,128)}', space=vmem, size = 0x12000, scoped, tag = 'internal scratch']
  %s0 = inlined_call_operand.vmem [shape: f32[128,16], index: 0, kind: input, shape index: {}]
  %s1 = inlined_call_operand.vmem [shape: bf16[32,16], index: 1, kind: input, shape index: {}]
  %s2 = inlined_call_operand.vmem [shape: f32[32,1], index: 2, kind: input, shape index: {}]
  %s3 = inlined_call_operand.vmem [shape: bf16[8,32], index: 3, kind: input, shape index: {}]
  %s4 = inlined_call_operand.vmem [shape: f32[8,1], index: 4, kind: input, shape index: {}]
  %s5 = inlined_call_operand.hbm [shape: s32[1,128], index: 5, kind: output, shape index: {}]
  %s6 = sld [smem:[#allocation0]]
  $region30: #{tpu_custom_call.1} parent=0
    _
  %s8 = ssub.s32 1, %s6
  %s9 = scalar_select 0, %s8, %s6
  $region1: #{tpu_custom_call.1} parent=0
    #allocation2 [shape = 'u8[512]{0}', space=vmem, size = 0x400, scoped, tag = 'output window, operand 0, single buffered']
    #allocation3 [shape = 's32[1]{0}', space=sflag, size = 0x4, scoped, tag = 'scoped memory for tpu_custom_call.1']
    %10 = vsyncpa [#allocation3], 0
    // Predicated region
    $region2: #{tpu_custom_call.1} parent=1 // pred_check
      _
    $region3: #{tpu_custom_call.1} parent=1 // pred_check_branch
      %12 = sbr.rel (0) target = $region5
    $region4: #{tpu_custom_call.1} parent=1 // pred_region
      _
    $region5: #{tpu_custom_call.1} parent=1 // pred_fallthru
      _
    // Predicated region
    $region6: #{tpu_custom_call.1} parent=1 // pred_check
      _
    $region7: #{tpu_custom_call.1} parent=1 // pred_check_branch
      %14 = sbr.rel (0) target = $region9
    $region8: #{tpu_custom_call.1} parent=1 // pred_region
      _
    $region9: #{tpu_custom_call.1} parent=1 // pred_fallthru
      _
    // Predicated region
    $region10: #{tpu_custom_call.1} parent=1 // pred_check
      _
    $region11: #{tpu_custom_call.1} parent=1 // pred_check_branch
      %16 = sbr.rel (0) target = $region13
    $region12: #{tpu_custom_call.1} parent=1 // pred_region
      _
    $region13: #{tpu_custom_call.1} parent=1 // pred_fallthru
      _
    // Predicated region
    $region14: #{tpu_custom_call.1} parent=1 // pred_check
      _
    $region15: #{tpu_custom_call.1} parent=1 // pred_check_branch
      %18 = sbr.rel (0) target = $region17
    $region16: #{tpu_custom_call.1} parent=1 // pred_region
      _
    $region17: #{tpu_custom_call.1} parent=1 // pred_fallthru
      _
    // Predicated region
    $region18: #{tpu_custom_call.1} parent=1 // pred_check
      _
    $region19: #{tpu_custom_call.1} parent=1 // pred_check_branch
      %20 = sbr.rel (0) target = $region21
    $region20: #{tpu_custom_call.1} parent=1 // pred_region
      _
    $region21: #{tpu_custom_call.1} parent=1 // pred_fallthru
      _
    %v22 = vld [vmem:[%s0] sm:$0xff]
    %v23 = vld [vmem:[%s0 + $0x8] sm:$0xff]
    %v24 = vld [vmem:[%s0 + $0x10] sm:$0xff]
    %v25 = vld [vmem:[%s0 + $0x18] sm:$0xff]
    %v26 = vld [vmem:[%s0 + $0x20] sm:$0xff]
    %v27 = vld [vmem:[%s0 + $0x28] sm:$0xff]
    %v28 = vld [vmem:[%s0 + $0x30] sm:$0xff]
    %v29 = vld [vmem:[%s0 + $0x38] sm:$0xff]
    %v30 = vld [vmem:[%s0 + $0x40] sm:$0xff]
    %v31 = vld [vmem:[%s0 + $0x48] sm:$0xff]
    %v32 = vld [vmem:[%s0 + $0x50] sm:$0xff]
    %v33 = vld [vmem:[%s0 + $0x58] sm:$0xff]
    %v34 = vld [vmem:[%s0 + $0x60] sm:$0xff]
    %v35 = vld [vmem:[%s0 + $0x68] sm:$0xff]
    %v36 = vld [vmem:[%s0 + $0x70] sm:$0xff]
    %v37 = vld [vmem:[%s0 + $0x78] sm:$0xff]
    %38 = vxpose.xlu0.b32.start [1/16] %v22, 128
    %39 = vxpose.xlu0.b32.cont [2/16] %v23, 128
    %40 = vxpose.xlu0.b32.cont [3/16] %v24, 128
    %41 = vxpose.xlu0.b32.cont [4/16] %v25, 128
    %42 = vxpose.xlu0.b32.cont [5/16] %v26, 128
    %43 = vxpose.xlu0.b32.cont [6/16] %v27, 128
    %44 = vxpose.xlu0.b32.cont [7/16] %v28, 128
    %45 = vxpose.xlu0.b32.cont [8/16] %v29, 128
    %46 = vxpose.xlu0.b32.cont [9/16] %v30, 128
    %47 = vxpose.xlu0.b32.cont [10/16] %v31, 128
    %48 = vxpose.xlu0.b32.cont [11/16] %v32, 128
    %49 = vxpose.xlu0.b32.cont [12/16] %v33, 128
    %50 = vxpose.xlu0.b32.cont [13/16] %v34, 128
    %51 = vxpose.xlu0.b32.cont [14/16] %v35, 128
    %52 = vxpose.xlu0.b32.cont [15/16] %v36, 128
    %53 = vxpose.xlu0.b32.end [16/16] %v37, 128
    %v54 = vpop.trf.xlu0
    %v55 = vpop.trf.xlu0
    %v56 = vpop.trf.xlu0
    %v57 = vpop.trf.xlu0
    %v58 = vpop.trf.xlu0
    %v59 = vpop.trf.xlu0
    %v60 = vpop.trf.xlu0
    %v61 = vpop.trf.xlu0
    %v62 = vpop.trf.xlu0
    %v63 = vpop.trf.xlu0
    %v64 = vpop.trf.xlu0
    %v65 = vpop.trf.xlu0
    %v66 = vpop.trf.xlu0
    %v67 = vpop.trf.xlu0
    %v68 = vpop.trf.xlu0
    %v69 = vpop.trf.xlu0
    %v70 = vpack.c.bf16 %v55, %v54
    %v71 = vld [vmem:[%s1] sm:$0xf]
    %v72 = vld [vmem:[%s1 + $0x4] sm:$0xf]
    %v73 = vld [vmem:[%s1 + $0x8] sm:$0xf]
    %v74 = vld [vmem:[%s1 + $0xc] sm:$0xf]
    %v75 = vld [vmem:[%s2] sm:$0xff]
    %v76 = vld [vmem:[%s2 + $0x8] sm:$0xff]
    %v77 = vld [vmem:[%s2 + $0x10] sm:$0xff]
    %v78 = vld [vmem:[%s2 + $0x18] sm:$0xff]
    %80 = vset.pattern.permute.xlu0 0
    %81 = vperm.xlu0 %80, %v75
    %v82 = vpop.permute.xlu0 %81
    %85 = vset.pattern.permute.xlu0 0
    %86 = vperm.xlu0 %85, %v76
    %v87 = vpop.permute.xlu0 %86
    %90 = vset.pattern.permute.xlu0 0
    %91 = vperm.xlu0 %90, %v77
    %v92 = vpop.permute.xlu0 %91
    %95 = vset.pattern.permute.xlu0 0
    %96 = vperm.xlu0 %95, %v78
    %v97 = vpop.permute.xlu0 %96
    %v103 = vunpack.c.l.b16 %v71
    %v104 = vunpack.c.l.b16 %v72
    %v105 = vunpack.c.l.b16 %v73
    %v106 = vunpack.c.l.b16 %v74
    %v107 = vpack.c.b16 %v104, %v103
    %v108 = vpack.c.b16 %v106, %v105
    %vm109 = vcmask 130048
    %v111 = vsel %vm109, %v107, 0
    %v114 = vsel %vm109, %v108, 0
    %116 = vmatprep.subr.bf16.mxu0 0
    %117 = vmatpush1.bf16.msra.mxu0 %v70
    %118 = vmatprep.subr.bf16.mxu0 0
    %119 = vmatpush1.bf16.msra.mxu0 0
    %120 = vmatprep.subr.bf16.mxu0 0
    %121 = vmatpush1.bf16.msra.mxu0 0
    %122 = vmatprep.subr.bf16.mxu0 0
    %123 = vmatpush1.bf16.msra.mxu0 0
    %124 = vmatprep.subr.bf16.mxu0 0
    %125 = vmatpush1.bf16.msra.mxu0 0
    %126 = vmatprep.subr.bf16.mxu0 0
    %127 = vmatpush1.bf16.msra.mxu0 0
    %128 = vmatprep.subr.bf16.mxu0 0
    %129 = vmatpush1.bf16.msra.mxu0 0
    %130 = vmatprep.subr.bf16.mxu0 0
    %131 = vmatpush1.bf16.msra.mxu0 0
    %132 = vmatprep.subr.bf16.mxu0 0
    %133 = vmatpush1.bf16.msra.mxu0 0
    %134 = vmatprep.subr.bf16.mxu0 0
    %135 = vmatpush1.bf16.msra.mxu0 0
    %136 = vmatprep.subr.bf16.mxu0 0
    %137 = vmatpush1.bf16.msra.mxu0 0
    %138 = vmatprep.subr.bf16.mxu0 0
    %139 = vmatpush1.bf16.msra.mxu0 0
    %140 = vmatprep.subr.bf16.mxu0 0
    %141 = vmatpush1.bf16.msra.mxu0 0
    %142 = vmatprep.subr.bf16.mxu0 0
    %143 = vmatpush1.bf16.msra.mxu0 0
    %144 = vmatprep.subr.bf16.mxu0 0
    %145 = vmatpush1.bf16.msra.mxu0 0
    %146 = vmatprep.subr.bf16.mxu0 0
    %147 = vmatpush1.bf16.msra.mxu0 0
    %148 = vmatprep.mubr.bf16.mxu0 0
    %149 = vmatmul.mubr.bf16.gmra.mrb[0].mxu0 %v111
    %v150 = vpop.f32.mrb[0].mxu0
    %v151 = vadd.f32 %v82, %v150
    %v152 = vpop.f32.mrb[0].mxu0
    %v153 = vpop.f32.mrb[0].mxu0
    %v154 = vadd.f32 %v87, %v153
    %v155 = vpop.f32.mrb[0].mxu0
    %156 = vmatprep.mubr.bf16.mxu0 0
    %157 = vmatmul.mubr.bf16.gmra.mrb[0].mxu0 %v114
    %v158 = vpop.f32.mrb[0].mxu0
    %v159 = vadd.f32 %v92, %v158
    %v160 = vpop.f32.mrb[0].mxu0
    %v161 = vpop.f32.mrb[0].mxu0
    %v162 = vadd.f32 %v97, %v161
    %v163 = vpop.f32.mrb[0].mxu0
    %164 = vdwg.mxu0
    %v165 = vmax.f32 %v151, 0.0
    %v166 = vmax.f32 %v154, 0.0
    %v167 = vmax.f32 %v159, 0.0
    %v168 = vmax.f32 %v162, 0.0
    %v169 = vld [vmem:[%s3] sm:$0xf]
    %v170 = vpack.c.bf16 %v166, %v165
    %v171 = vpack.c.bf16 %v168, %v167
    %v172 = vld [vmem:[%s4] sm:$0xff]
    %174 = vset.pattern.permute.xlu0 0
    %175 = vperm.xlu0 %174, %v172
    %v176 = vpop.permute.xlu0 %175
    %vm178 = vcmask 261120
    %v180 = vsel %vm178, %v169, 0
    %182 = vmatprep.subr.bf16.mxu0 0
    %183 = vmatpush1.bf16.msra.mxu0 %v170
    %184 = vmatprep.subr.bf16.mxu0 0
    %185 = vmatpush1.bf16.msra.mxu0 %v171
    %186 = vmatprep.subr.bf16.mxu0 0
    %187 = vmatpush1.bf16.msra.mxu0 0
    %188 = vmatprep.subr.bf16.mxu0 0
    %189 = vmatpush1.bf16.msra.mxu0 0
    %190 = vmatprep.subr.bf16.mxu0 0
    %191 = vmatpush1.bf16.msra.mxu0 0
    %192 = vmatprep.subr.bf16.mxu0 0
    %193 = vmatpush1.bf16.msra.mxu0 0
    %194 = vmatprep.subr.bf16.mxu0 0
    %195 = vmatpush1.bf16.msra.mxu0 0
    %196 = vmatprep.subr.bf16.mxu0 0
    %197 = vmatpush1.bf16.msra.mxu0 0
    %198 = vmatprep.subr.bf16.mxu0 0
    %199 = vmatpush1.bf16.msra.mxu0 0
    %200 = vmatprep.subr.bf16.mxu0 0
    %201 = vmatpush1.bf16.msra.mxu0 0
    %202 = vmatprep.subr.bf16.mxu0 0
    %203 = vmatpush1.bf16.msra.mxu0 0
    %204 = vmatprep.subr.bf16.mxu0 0
    %205 = vmatpush1.bf16.msra.mxu0 0
    %206 = vmatprep.subr.bf16.mxu0 0
    %207 = vmatpush1.bf16.msra.mxu0 0
    %208 = vmatprep.subr.bf16.mxu0 0
    %209 = vmatpush1.bf16.msra.mxu0 0
    %210 = vmatprep.subr.bf16.mxu0 0
    %211 = vmatpush1.bf16.msra.mxu0 0
    %212 = vmatprep.subr.bf16.mxu0 0
    %213 = vmatpush1.bf16.msra.mxu0 0
    %214 = vmatprep.mubr.bf16.mxu0 0
    %215 = vmatmul.mubr.bf16.gmra.mrb[0].mxu0 %v180
    %v216 = vpop.f32.mrb[0].mxu0
    %v217 = vadd.f32 %v176, %v216
    %v218 = vpop.f32.mrb[0].mxu0
    %v219 = vpop.f32.mrb[0].mxu0
    %v220 = vpop.f32.mrb[0].mxu0
    %221 = vdwg.mxu0
    %v222 = vrot.slane %v217, 4
    %v223 = vmax.f32 %v217, %v222
    %v224 = vrot.slane %v223, 2
    %v225 = vmax.f32 %v223, %v224
    %v226 = vrot.slane %v225, 1
    %v227 = vmax.f32 %v225, %v226
    %v228 = vlaneseq
    %v229 = vshrl.u32 %v228, 7
    %vm230 = vcmp.eq.f32.partialorder %v217, %v227
    %v231 = vsel %vm230, %v229, 8
    %v232 = vrot.slane %v231, 4
    %vm233 = vcmp.lt.s32.totalorder %v231, %v232
    %v234 = vsel %vm233, %v231, %v232
    %v235 = vrot.slane %v234, 2
    %vm236 = vcmp.lt.s32.totalorder %v234, %v235
    %v237 = vsel %vm236, %v234, %v235
    %v238 = vrot.slane %v237, 1
    %vm239 = vcmp.lt.s32.totalorder %v237, %v238
    %v240 = vsel %vm239, %v237, %v238
    %241 = vst [vmem:[#allocation2] sm:$0x1] %v240
    // Predicated region
    $region22: #{tpu_custom_call.1} parent=1 // pred_check
      _
    $region23: #{tpu_custom_call.1} parent=1 // pred_check_branch
      %243 = sbr.rel (0) target = $region25
    $region24: #{tpu_custom_call.1} parent=1 // pred_region
      %s245 = ssub.s32 16, 16
      %246 = vsyncadd [#allocation3], %s245
      %s248 = sshll.u32 [#allocation2], 4
      %s249 = int_to_ptr.vmem [resolvable:$true] %s248
      %251 = dma.vmem_to_hbm [thread:$0]  %s249, 16, %s5, [#allocation3]
    $region25: #{tpu_custom_call.1} parent=1 // pred_fallthru
      _
    // Predicated region
    $region26: #{tpu_custom_call.1} parent=1 // pred_check
      _
    $region27: #{tpu_custom_call.1} parent=1 // pred_check_branch
      %253 = sbr.rel (0) target = $region29
    $region28: #{tpu_custom_call.1} parent=1 // pred_region
      %254 = dma.done [#allocation3], 16
    $region29: #{tpu_custom_call.1} parent=1 // pred_fallthru
      _
    %255 = vsyncpa [#allocation3], 1

</llo_original>
